<compile_context>
chip_gen: v7x
topology: tpu7x:2x2x1
jax: 0.10.0
libtpu: 0.0.40
codegen_flags: <defaults>
</compile_context>

<pallas_src>
import functools

import jax
import jax.numpy as jnp
from jax import lax
from jax.experimental import pallas as pl
from jax.experimental.pallas import tpu as pltpu


# ---------------------------------------------------------------------------
# Tile-budget helper: biggest batch block that fits comfortably in scoped VMEM
# (double-buffered) while keeping >= min_steps grid steps (v7x megacore).
# ---------------------------------------------------------------------------
def _pick_block_b(total_b, bytes_per_b, *, min_steps=2):
    try:
        cap = int(pltpu.get_tpu_info().vmem_capacity_bytes)   # 64 MiB v7x, 128 MiB v5e/v6e
    except Exception:                                          # pragma: no cover
        cap = 64 * 1024 * 1024
    budget = cap // 8                                          # headroom for double-buffering etc.
    fit = max(1, budget // max(1, 2 * int(bytes_per_b)))
    steps_cap = max(1, (total_b + min_steps - 1) // min_steps)
    return int(max(1, min(total_b, fit, steps_cap)))


# ---------------------------------------------------------------------------
# Shared in-kernel router head:
#   f = [max(x1); max(x2); avg(x1); avg(x2)]  (channel pooling of cat(x1,x2))
#   MLP (Linear-ReLU-Linear) as VPU broadcast-mul + lane reduction, relu(tanh(.)).
# ---------------------------------------------------------------------------
def _router_mlp(x1, x2, w1, b1, w2, b2):
    hw = x1.shape[-1]
    inv = jnp.float32(1.0 / hw)
    f = jnp.concatenate(
        [jnp.max(x1, axis=-1), jnp.max(x2, axis=-1),
         jnp.sum(x1, axis=-1) * inv, jnp.sum(x2, axis=-1) * inv], axis=-1)   # (Bt, 4E)
    h = jnp.sum(f[:, None, :] * w1[None, :, :], axis=-1) + b1                # (Bt, 2E)
    h = jnp.maximum(h, 0.0)
    z = jnp.sum(h[:, None, :] * w2[None, :, :], axis=-1) + b2                # (Bt, P)
    return jnp.maximum(jnp.tanh(z), 0.0)


# ---------------------------------------------------------------------------
# ChannelCell: fused router + two ECAAttention gates.
# ---------------------------------------------------------------------------
def _channel_cell_kernel(rw1_ref, rb1_ref, rw2_ref, rb2_ref,
                         e1w_ref, e1b_ref, e2w_ref, e2b_ref,
                         x1_ref, x2_ref,
                         e1_ref, e2_ref, pp_ref):
    f32 = jnp.float32
    x1 = x1_ref[...].astype(f32)                                # (Bt, E, HW)
    x2 = x2_ref[...].astype(f32)
    bt, E, hw = x1.shape
    inv_hw = f32(1.0 / hw)

    # Router (reads the same x1/x2 the ECA gates already have in VMEM).
    pp = _router_mlp(x1, x2, rw1_ref[...], rb1_ref[...], rw2_ref[...], rb2_ref[...])
    pp_ref[...] = pp[:, None, :].astype(pp_ref.dtype)           # (Bt, 1, P), P on lanes

    # ECAAttention: global-avg-pool -> k=3 channel conv (zero padded) -> sigmoid gate.
    def eca_gate(x, w_ref, b_ref):
        g = jnp.sum(x, axis=-1, keepdims=True) * inv_hw          # (Bt, E, 1)
        zc = jnp.zeros((bt, 1, 1), f32)
        gpad = jnp.concatenate([zc, g, zc], axis=1)              # (Bt, E+2, 1)
        y = (w_ref[0] * gpad[:, :E, :] + w_ref[1] * g
             + w_ref[2] * gpad[:, 2:, :] + b_ref[0])
        return jax.nn.sigmoid(y)                                 # (Bt, E, 1)

    e1_ref[...] = (x1 * eca_gate(x1, e1w_ref, e1b_ref)).astype(e1_ref.dtype)
    e2_ref[...] = (x2 * eca_gate(x2, e2w_ref, e2b_ref)).astype(e2_ref.dtype)


def channel_cell(x1, x2, eca1_w, eca1_b, eca2_w, eca2_b, rp, *, block_b=None):
    B, E, H, W = x1.shape
    HW = H * W
    P = rp["w2"].shape[0]
    if block_b is None:
        block_b = _pick_block_b(B, 4 * E * HW * 4)
    grid_b = pl.cdiv(B, block_b)
    full2 = lambda i: (0, 0)
    xmap = lambda i: (i, 0, 0)

    e1, e2, pp = pl.pallas_call(
        _channel_cell_kernel,
        out_shape=(
            jax.ShapeDtypeStruct((B, E, HW), x1.dtype),
            jax.ShapeDtypeStruct((B, E, HW), x2.dtype),
            jax.ShapeDtypeStruct((B, 1, P), jnp.float32),
        ),
        grid_spec=pltpu.PrefetchScalarGridSpec(
            num_scalar_prefetch=0,
            grid=(grid_b,),
            in_specs=[
                pl.BlockSpec((2 * E, 4 * E), full2),                       # router w1
                pl.BlockSpec((1, 2 * E), full2),                           # router b1
                pl.BlockSpec((P, 2 * E), full2),                           # router w2
                pl.BlockSpec((1, P), full2),                               # router b2
                pl.BlockSpec(memory_space=pltpu.MemorySpace.SMEM),         # eca1 taps (3,)
                pl.BlockSpec(memory_space=pltpu.MemorySpace.SMEM),         # eca1 bias (1,)
                pl.BlockSpec(memory_space=pltpu.MemorySpace.SMEM),         # eca2 taps
                pl.BlockSpec(memory_space=pltpu.MemorySpace.SMEM),         # eca2 bias
                pl.BlockSpec((block_b, E, HW), xmap),
                pl.BlockSpec((block_b, E, HW), xmap),
            ],
            out_specs=(
                pl.BlockSpec((block_b, E, HW), xmap),
                pl.BlockSpec((block_b, E, HW), xmap),
                pl.BlockSpec((block_b, 1, P), xmap),
            ),
        ),
        compiler_params=pltpu.CompilerParams(dimension_semantics=("parallel",)),
    )(rp["w1"], rp["b1"].reshape(1, 2 * E), rp["w2"], rp["b2"].reshape(1, P),
      eca1_w, eca1_b, eca2_w, eca2_b,
      x1.reshape(B, E, HW), x2.reshape(B, E, HW))
    return e1.reshape(B, E, H, W), e2.reshape(B, E, H, W), pp[:, 0, :]


# ---------------------------------------------------------------------------
# SpatailCell: fused router + SpatialGroupEnhance on BOTH inputs (the PyTorch
# module applies spatial_att_1 to both).  Groups live on sublanes inside the
# batch block — no (B, groups) grid.
# ---------------------------------------------------------------------------
def _spatial_cell_kernel(rw1_ref, rb1_ref, rw2_ref, rb2_ref,
                         sw_ref, sb_ref, x1_ref, x2_ref,
                         e1_ref, e2_ref, pp_ref, *, groups):
    f32 = jnp.float32
    x1 = x1_ref[...].astype(f32)                                # (Bt, E, HW)
    x2 = x2_ref[...].astype(f32)
    bt, E, hw = x1.shape
    cg = E // groups
    inv_hw = f32(1.0 / hw)
    inv_hw1 = f32(1.0 / max(hw - 1, 1))                         # torch .std() is unbiased (ddof=1)

    pp = _router_mlp(x1, x2, rw1_ref[...], rb1_ref[...], rw2_ref[...], rb2_ref[...])
    pp_ref[...] = pp[:, None, :].astype(pp_ref.dtype)

    sw = sw_ref[...].reshape(1, groups, 1)
    sb = sb_ref[...].reshape(1, groups, 1)

    def sge(x):
        m = jnp.sum(x, axis=-1, keepdims=True) * inv_hw         # per-channel mean (Bt, E, 1)
        if cg == 1:                                              # common case: no reshapes at all
            t = x * m                                            # (Bt, G==E, HW)
        else:
            t = jnp.sum((x * m).reshape(bt, groups, cg, hw), axis=2)   # (Bt, G, HW)
        mu = jnp.sum(t, axis=-1, keepdims=True) * inv_hw
        tc = t - mu
        var = jnp.sum(tc * tc, axis=-1, keepdims=True) * inv_hw1
        gate = jax.nn.sigmoid((tc / (jnp.sqrt(var) + 1e-5)) * sw + sb)  # (Bt, G, HW)
        if cg == 1:
            return x * gate
        return (x.reshape(bt, groups, cg, hw) * gate[:, :, None, :]).reshape(bt, E, hw)

    e1_ref[...] = sge(x1).astype(e1_ref.dtype)
    e2_ref[...] = sge(x2).astype(e2_ref.dtype)


def spatial_cell(x1, x2, sge_w, sge_b, groups, rp, *, block_b=None):
    B, E, H, W = x1.shape
    HW = H * W
    P = rp["w2"].shape[0]
    assert E % groups == 0
    if block_b is None:
        block_b = _pick_block_b(B, 4 * E * HW * 4)
    grid_b = pl.cdiv(B, block_b)
    full2 = lambda i: (0, 0)
    xmap = lambda i: (i, 0, 0)
    kernel = functools.partial(_spatial_cell_kernel, groups=groups)

    e1, e2, pp = pl.pallas_call(
        kernel,
        out_shape=(
            jax.ShapeDtypeStruct((B, E, HW), x1.dtype),
            jax.ShapeDtypeStruct((B, E, HW), x2.dtype),
            jax.ShapeDtypeStruct((B, 1, P), jnp.float32),
        ),
        grid_spec=pltpu.PrefetchScalarGridSpec(
            num_scalar_prefetch=0,
            grid=(grid_b,),
            in_specs=[
                pl.BlockSpec((2 * E, 4 * E), full2),
                pl.BlockSpec((1, 2 * E), full2),
                pl.BlockSpec((P, 2 * E), full2),
                pl.BlockSpec((1, P), full2),
                pl.BlockSpec((groups, 1), full2),                          # SGE weight
                pl.BlockSpec((groups, 1), full2),                          # SGE bias
                pl.BlockSpec((block_b, E, HW), xmap),
                pl.BlockSpec((block_b, E, HW), xmap),
            ],
            out_specs=(
                pl.BlockSpec((block_b, E, HW), xmap),
                pl.BlockSpec((block_b, E, HW), xmap),
                pl.BlockSpec((block_b, 1, P), xmap),
            ),
        ),
        compiler_params=pltpu.CompilerParams(dimension_semantics=("parallel",)),
    )(rp["w1"], rp["b1"].reshape(1, 2 * E), rp["w2"], rp["b2"].reshape(1, P),
      sge_w.reshape(groups, 1).astype(jnp.float32),
      sge_b.reshape(groups, 1).astype(jnp.float32),
      x1.reshape(B, E, HW), x2.reshape(B, E, HW))
    return e1.reshape(B, E, H, W), e2.reshape(B, E, H, W), pp[:, 0, :]


# ---------------------------------------------------------------------------
# R2TCell / T2RCell: fused router + MutualAttention (+ residual on the query
# stream).  wk/wv concatenated -> single (2E, E) matmul; projections batched
# across the whole block as (E, E) @ (E, Bt*HW); per-batch gram/softmax in a
# short unrolled loop.  Heads handled with a block-diagonal mask on (E, E).
# ---------------------------------------------------------------------------
def _cross_cell_kernel(rw1_ref, rb1_ref, rw2_ref, rb2_ref,
                       wq_ref, wkv_ref, wp_ref, temp_ref,
                       x1_ref, x2_ref,
                       cross_ref, pp_ref, *, head_dim, q_is_first):
    f32 = jnp.float32
    x1 = x1_ref[...].astype(f32)
    x2 = x2_ref[...].astype(f32)
    bt, E, hw = x1.shape

    pp = _router_mlp(x1, x2, rw1_ref[...], rb1_ref[...], rw2_ref[...], rb2_ref[...])
    pp_ref[...] = pp[:, None, :].astype(pp_ref.dtype)

    xq = x1 if q_is_first else x2      # query / residual stream
    xkv = x2 if q_is_first else x1     # key / value stream

    if bt == 1:
        xq_f, xkv_f = xq[0], xkv[0]                                        # (E, HW)
    else:
        xq_f = jnp.concatenate([xq[b] for b in range(bt)], axis=-1)        # (E, Bt*HW)
        xkv_f = jnp.concatenate([xkv[b] for b in range(bt)], axis=-1)
    q_all = jnp.dot(wq_ref[...], xq_f, preferred_element_type=f32)         # (E, Bt*HW)
    kv_all = jnp.dot(wkv_ref[...], xkv_f, preferred_element_type=f32)      # (2E, Bt*HW)

    temp = temp_ref[...]                                                   # (E, 1) per-head temps
    head_r = lax.broadcasted_iota(jnp.int32, (E, E), 0) // head_dim
    head_c = lax.broadcasted_iota(jnp.int32, (E, E), 1) // head_dim
    same_head = head_r == head_c
    wp = wp_ref[...]

    for b in range(bt):                                                    # short, unrolled
        q = q_all[:, b * hw:(b + 1) * hw]
        k = kv_all[:E, b * hw:(b + 1) * hw]
        v = kv_all[E:, b * hw:(b + 1) * hw]
        # F.normalize(dim=-1): divide by max(||row||, 1e-12)
        qn = q / jnp.maximum(jnp.sqrt(jnp.sum(q * q, axis=-1, keepdims=True)), 1e-12)
        kn = k / jnp.maximum(jnp.sqrt(jnp.sum(k * k, axis=-1, keepdims=True)), 1e-12)
        gram = lax.dot_general(qn, kn, (((1,), (1,)), ((), ())),
                               preferred_element_type=f32)                 # (E, E)
        logits = jnp.where(same_head, gram * temp, f32(-1e30))
        logits = logits - jnp.max(logits, axis=-1, keepdims=True)
        p = jnp.exp(logits)
        p = p / jnp.sum(p, axis=-1, keepdims=True)                         # masked entries -> 0
        out = jnp.dot(p, v, preferred_element_type=f32)                    # (E, HW)
        out = jnp.dot(wp, out, preferred_element_type=f32)                 # project_out
        cross_ref[b] = (xq[b] + out).astype(cross_ref.dtype)               # residual


def cross_cell(x1, x2, mp, rp, num_heads, *, q_is_first, block_b=None):
    B, E, H, W = x1.shape
    HW = H * W
    P = rp["w2"].shape[0]
    head_dim = E // num_heads
    temp_row = jnp.repeat(mp["temp"].reshape(num_heads), head_dim).reshape(E, 1)
    temp_row = temp_row.astype(jnp.float32)
    wkv = jnp.concatenate([mp["wk"], mp["wv"]], axis=0)                    # (2E, E)
    if block_b is None:
        block_b = _pick_block_b(B, 3 * E * HW * 4)
    grid_b = pl.cdiv(B, block_b)
    full2 = lambda i: (0, 0)
    xmap = lambda i: (i, 0, 0)
    kernel = functools.partial(_cross_cell_kernel, head_dim=head_dim,
                               q_is_first=q_is_first)

    cross, pp = pl.pallas_call(
        kernel,
        out_shape=(
            jax.ShapeDtypeStruct((B, E, HW), x1.dtype),
            jax.ShapeDtypeStruct((B, 1, P), jnp.float32),
        ),
        grid_spec=pltpu.PrefetchScalarGridSpec(
            num_scalar_prefetch=0,
            grid=(grid_b,),
            in_specs=[
                pl.BlockSpec((2 * E, 4 * E), full2),
                pl.BlockSpec((1, 2 * E), full2),
                pl.BlockSpec((P, 2 * E), full2),
                pl.BlockSpec((1, P), full2),
                pl.BlockSpec((E, E), full2),                               # wq
                pl.BlockSpec((2 * E, E), full2),                           # [wk; wv]
                pl.BlockSpec((E, E), full2),                               # wp
                pl.BlockSpec((E, 1), full2),                               # per-row temperature
                pl.BlockSpec((block_b, E, HW), xmap),
                pl.BlockSpec((block_b, E, HW), xmap),
            ],
            out_specs=(
                pl.BlockSpec((block_b, E, HW), xmap),
                pl.BlockSpec((block_b, 1, P), xmap),
            ),
        ),
        compiler_params=pltpu.CompilerParams(dimension_semantics=("parallel",)),
    )(rp["w1"], rp["b1"].reshape(1, 2 * E), rp["w2"], rp["b2"].reshape(1, P),
      mp["wq"], wkv, mp["wp"], temp_row,
      x1.reshape(B, E, HW), x2.reshape(B, E, HW))
    return cross.reshape(B, E, H, W), pp[:, 0, :]


# ---------------------------------------------------------------------------
# Final gated fusion — BOTH streams and all num_out_path outputs in one pass:
#   res_s[b, i] = sum_j gate[b, i, j] * emb_j_s[b]
# ---------------------------------------------------------------------------
def _combine2_kernel(g_ref,
                     a0_ref, a1_ref, a2_ref, a3_ref,
                     c0_ref, c1_ref, c2_ref, c3_ref,
                     o1_ref, o2_ref, *, num_path):
    num_cell = 4
    bt = o1_ref.shape[0]
    base_b = pl.program_id(0) * bt
    a_refs = (a0_ref, a1_ref, a2_ref, a3_ref)
    c_refs = (c0_ref, c1_ref, c2_ref, c3_ref)
    for bb in range(bt):
        ea = [r[bb].astype(jnp.float32) for r in a_refs]                   # each (E, HW), read once
        ec = [r[bb].astype(jnp.float32) for r in c_refs]
        gbase = (base_b + bb) * (num_path * num_cell)
        for i in range(num_path):
            w = [g_ref[gbase + i * num_cell + j] for j in range(num_cell)]
            acc1 = w[0] * ea[0] + w[1] * ea[1] + w[2] * ea[2] + w[3] * ea[3]
            acc2 = w[0] * ec[0] + w[1] * ec[1] + w[2] * ec[2] + w[3] * ec[3]
            o1_ref[bb, i] = acc1.astype(o1_ref.dtype)
            o2_ref[bb, i] = acc2.astype(o2_ref.dtype)


def weighted_combine2(gates, embs1, embs2, *, block_b=None):
    """gates: (B, P, 4); embs1/embs2: 4 arrays (B, E, H, W) each.
    Returns res1, res2: (B, P, E, H, W)."""
    B, P, nc = gates.shape
    assert nc == 4
    E, H, W = embs1[0].shape[1:]
    HW = H * W
    dt = embs1[0].dtype
    if block_b is None:
        block_b = _pick_block_b(B, (8 + 2 * P) * E * HW * 4)
    grid_b = pl.cdiv(B, block_b)

    # Pad the SMEM gate table so padded tail blocks never index out of bounds.
    Bp = grid_b * block_b
    g = gates.astype(jnp.float32)
    if Bp != B:
        g = jnp.pad(g, ((0, Bp - B), (0, 0), (0, 0)))

    emb_spec = pl.BlockSpec((block_b, E, HW), lambda i: (i, 0, 0))
    out_spec = pl.BlockSpec((block_b, P, E, HW), lambda i: (i, 0, 0, 0))
    kernel = functools.partial(_combine2_kernel, num_path=P)
    flat = lambda z: z.reshape(B, E, HW)

    res1, res2 = pl.pallas_call(
        kernel,
        out_shape=(jax.ShapeDtypeStruct((B, P, E, HW), dt),
                   jax.ShapeDtypeStruct((B, P, E, HW), dt)),
        grid_spec=pltpu.PrefetchScalarGridSpec(
            num_scalar_prefetch=0,
            grid=(grid_b,),
            in_specs=[pl.BlockSpec(memory_space=pltpu.MemorySpace.SMEM)] + [emb_spec] * 8,
            out_specs=(out_spec, out_spec),
        ),
        compiler_params=pltpu.CompilerParams(dimension_semantics=("parallel",)),
    )(g.reshape(-1),
      flat(embs1[0]), flat(embs1[1]), flat(embs1[2]), flat(embs1[3]),
      flat(embs2[0]), flat(embs2[1]), flat(embs2[2]), flat(embs2[3]))
    return res1.reshape(B, P, E, H, W), res2.reshape(B, P, E, H, W)


# ---------------------------------------------------------------------------
# DynamicFusion_Layer forward
# ---------------------------------------------------------------------------
def dynamic_fusion_layer(aggr_embed, params, *, num_heads=4, groups=8):
    (x00, x01), (x10, x11), (x20, x21), (x30, x31) = aggr_embed
    P = params["router_channel"]["w2"].shape[0]

    # Cell 0: ChannelCell (router + two ECA branches, one fused kernel)
    e00, e01, pp0 = channel_cell(x00, x01, params["eca1_w"], params["eca1_b"],
                                 params["eca2_w"], params["eca2_b"],
                                 params["router_channel"])
    # Cell 1: SpatailCell (router + SGE; the PyTorch module applies att_1 to BOTH inputs)
    e10, e11, pp1 = spatial_cell(x10, x11, params["sge_w"], params["sge_b"],
                                 groups, params["router_spatial"])
    # Cell 2: R2TCell -> [x1, x2 + MutualAttention(x2, x1)]
    e21, pp2 = cross_cell(x20, x21, params["ma_r2t"], params["router_r2t"],
                          num_heads, q_is_first=False)
    e20 = x20
    # Cell 3: T2RCell -> [x1 + MutualAttention(x1, x2), x2]
    e30, pp3 = cross_cell(x30, x31, params["ma_t2r"], params["router_t2r"],
                          num_heads, q_is_first=True)
    e31 = x31

    # Tiny (B, P, 4) normalization kept in plain JAX glue.
    all_pp = jnp.stack([pp0, pp1, pp2, pp3], axis=2)                       # (B, P, 4)
    if P > 1:
        gates = all_pp / (jnp.sum(all_pp, axis=-1, keepdims=True) + 1e-8)
    else:
        gates = all_pp                                                     # num_out_path == 1: no renorm

    res1, res2 = weighted_combine2(gates, (e00, e10, e20, e30), (e01, e11, e21, e31))
    return [[res1[:, i], res2[:, i]] for i in range(P)]


# ---------------------------------------------------------------------------
# Pure-JAX reference mirroring the PyTorch forward (verification only)
# ---------------------------------------------------------------------------
_HI = lax.Precision.HIGHEST


def _eca_ref(x, w, b):
    g = jnp.mean(x, axis=(2, 3))
    gp = jnp.pad(g, ((0, 0), (1, 1)))
    y = w[0] * gp[:, :-2] + w[1] * gp[:, 1:-1] + w[2] * gp[:, 2:] + b[0]
    return x * jax.nn.sigmoid(y)[:, :, None, None]


def _sge_ref(x, weight, bias, groups):
    b, c, h, w = x.shape
    xg = x.reshape(b * groups, c // groups, h, w)
    m = jnp.mean(xg, axis=(2, 3), keepdims=True)
    xn = jnp.sum(xg * m, axis=1, keepdims=True)
    t = xn.reshape(b * groups, -1)
    t = t - jnp.mean(t, axis=1, keepdims=True)
    std = jnp.std(t, axis=1, keepdims=True, ddof=1) + 1e-5
    t = t / std
    t = t.reshape(b, groups, h, w)
    t = t * weight.reshape(1, groups, 1, 1) + bias.reshape(1, groups, 1, 1)
    t = t.reshape(b * groups, 1, h, w)
    return (xg * jax.nn.sigmoid(t)).reshape(b, c, h, w)


def _mutual_ref(x, y, mp, num_heads):
    b, C, h, w = x.shape
    hw = h * w
    conv1x1 = lambda W, z: jnp.einsum("oi,bihw->bohw", W, z, precision=_HI)
    q, k, v = conv1x1(mp["wq"], x), conv1x1(mp["wk"], y), conv1x1(mp["wv"], y)
    c = C // num_heads
    rs = lambda z: z.reshape(b, num_heads, c, hw)
    q, k, v = rs(q), rs(k), rs(v)
    l2n = lambda z: z / jnp.maximum(
        jnp.sqrt(jnp.sum(z * z, axis=-1, keepdims=True)), 1e-12)
    q, k = l2n(q), l2n(k)
    attn = jnp.einsum("bhcd,bhed->bhce", q, k, precision=_HI)
    attn = attn * mp["temp"].reshape(1, num_heads, 1, 1)
    attn = jax.nn.softmax(attn, axis=-1)
    out = jnp.einsum("bhce,bhed->bhcd", attn, v, precision=_HI).reshape(b, C, h, w)
    return conv1x1(mp["wp"], out)


def _router_ref(x1, x2, rp):
    x12 = jnp.concatenate([x1, x2], axis=1)
    mx = jnp.max(x12, axis=(2, 3))
    av = jnp.mean(x12, axis=(2, 3))
    f = jnp.concatenate([mx, av], axis=1)
    h = jnp.maximum(jnp.dot(f, rp["w1"].T, precision=_HI) + rp["b1"], 0.0)
    z = jnp.dot(h, rp["w2"].T, precision=_HI) + rp["b2"]
    return jnp.maximum(jnp.tanh(z), 0.0)


def _dynamic_fusion_ref(aggr_embed, params, *, num_heads=4, groups=8):
    (x00, x01), (x10, x11), (x20, x21), (x30, x31) = aggr_embed
    P = params["router_channel"]["w2"].shape[0]
    pp = [
        _router_ref(x00, x01, params["router_channel"]),
        _router_ref(x10, x11, params["router_spatial"]),
        _router_ref(x20, x21, params["router_r2t"]),
        _router_ref(x30, x31, params["router_t2r"]),
    ]
    emb = [
        [_eca_ref(x00, params["eca1_w"], params["eca1_b"]),
         _eca_ref(x01, params["eca2_w"], params["eca2_b"])],
        [_sge_ref(x10, params["sge_w"], params["sge_b"], groups),
         _sge_ref(x11, params["sge_w"], params["sge_b"], groups)],
        [x20, x21 + _mutual_ref(x21, x20, params["ma_r2t"], num_heads)],
        [x30 + _mutual_ref(x30, x31, params["ma_t2r"], num_heads), x31],
    ]
    all_pp = jnp.stack(pp, axis=2)
    if P > 1:
        all_pp = all_pp / (jnp.sum(all_pp, axis=-1, keepdims=True) + 1e-8)
    res = []
    for i in range(P):
        r1, r2 = 0.0, 0.0
        for j in range(4):
            wj = all_pp[:, i, j][:, None, None, None]
            r1 = r1 + wj * emb[j][0]
            r2 = r2 + wj * emb[j][1]
        res.append([r1, r2])
    return res


# ---------------------------------------------------------------------------
if __name__ == "__main__":
    B, E, H, W = 2, 8, 16, 16          # embed_size=8, H*W=256 (lane-dense)
    P = 2                              # num_out_path
    NUM_HEADS = 4
    GROUPS = 8

    key = jax.random.PRNGKey(0)
    kit = iter(jax.random.split(key, 64))

    def rnd(shape, scale=1.0):
        return jax.random.normal(next(kit), shape, dtype=jnp.float32) * scale

    aggr = [[rnd((B, E, H, W)), rnd((B, E, H, W))] for _ in range(4)]

    def router_params():
        return dict(w1=rnd((2 * E, 4 * E), 0.2), b1=rnd((2 * E,), 0.1),
                    w2=rnd((P, 2 * E), 0.2), b2=rnd((P,), 0.1) + 1.5)

    def ma_params():
        return dict(wq=rnd((E, E), 0.25), wk=rnd((E, E), 0.25),
                    wv=rnd((E, E), 0.25), wp=rnd((E, E), 0.25),
                    temp=jnp.abs(rnd((NUM_HEADS,), 1.0)) + 0.5)

    params = dict(
        router_channel=router_params(),
        router_spatial=router_params(),
        router_r2t=router_params(),
        router_t2r=router_params(),
        eca1_w=rnd((3,), 0.5), eca1_b=rnd((1,), 0.1),
        eca2_w=rnd((3,), 0.5), eca2_b=rnd((1,), 0.1),
        sge_w=rnd((GROUPS,), 0.5), sge_b=rnd((GROUPS,), 0.1),
        ma_r2t=ma_params(),
        ma_t2r=ma_params(),
    )

    out = dynamic_fusion_layer(aggr, params, num_heads=NUM_HEADS, groups=GROUPS)
    out = jax.block_until_ready(out)

    ref = _dynamic_fusion_ref(aggr, params, num_heads=NUM_HEADS, groups=GROUPS)
    for i in range(P):
        for s in range(2):
            assert out[i][s].shape == (B, E, H, W)
            assert jnp.allclose(out[i][s], ref[i][s], atol=1e-3, rtol=1e-3), (
                f"mismatch vs reference at path {i}, stream {s}")

    print("KERNEL_OK")
</pallas_src>

<mosaic_0001>
module attributes {stable_mosaic.version = 11 : i64} {
  func.func @_channel_cell_kernel(%arg0: i32, %arg1: memref<16x32xf32, #tpu.memory_space<vmem>>, %arg2: memref<1x16xf32, #tpu.memory_space<vmem>>, %arg3: memref<2x16xf32, #tpu.memory_space<vmem>>, %arg4: memref<1x2xf32, #tpu.memory_space<vmem>>, %arg5: memref<3xf32, #tpu.memory_space<smem>>, %arg6: memref<1xf32, #tpu.memory_space<smem>>, %arg7: memref<3xf32, #tpu.memory_space<smem>>, %arg8: memref<1xf32, #tpu.memory_space<smem>>, %arg9: memref<1x8x256xf32, #tpu.memory_space<vmem>>, %arg10: memref<1x8x256xf32, #tpu.memory_space<vmem>>, %arg11: memref<1x8x256xf32, #tpu.memory_space<vmem>>, %arg12: memref<1x8x256xf32, #tpu.memory_space<vmem>>, %arg13: memref<1x1x2xf32, #tpu.memory_space<vmem>>) attributes {dimension_semantics = [#tpu.dimension_semantics<parallel>], iteration_bounds = array<i64: 2>, scalar_prefetch = 0 : i64, scratch_operands = 0 : i64, tpu.core_type = #tpu.core_type<tc>, window_params = [{pipeline_mode = #tpu.pipeline_mode<synchronous>, transform_indices = @transform_0, window_bounds = array<i64: 16, 32>}, {pipeline_mode = #tpu.pipeline_mode<synchronous>, transform_indices = @transform_1, window_bounds = array<i64: 1, 16>}, {pipeline_mode = #tpu.pipeline_mode<synchronous>, transform_indices = @transform_2, window_bounds = array<i64: 2, 16>}, {pipeline_mode = #tpu.pipeline_mode<synchronous>, transform_indices = @transform_3, window_bounds = array<i64: 1, 2>}, {transform_indices = @transform_4, window_bounds = array<i64: 3>}, {transform_indices = @transform_5, window_bounds = array<i64: 1>}, {transform_indices = @transform_6, window_bounds = array<i64: 3>}, {transform_indices = @transform_7, window_bounds = array<i64: 1>}, {transform_indices = @transform_8, window_bounds = array<i64: 1, 8, 256>}, {transform_indices = @transform_9, window_bounds = array<i64: 1, 8, 256>}, {transform_indices = @transform_10, window_bounds = array<i64: 1, 8, 256>}, {transform_indices = @transform_11, window_bounds = array<i64: 1, 8, 256>}, {transform_indices = @transform_12, window_bounds = array<i64: 1, 1, 2>}]} {
    %c0 = arith.constant 0 : index
    %c0_0 = arith.constant 0 : index
    %c0_1 = arith.constant 0 : index
    %0 = vector.load %arg9[%c0, %c0_0, %c0_1] : memref<1x8x256xf32, #tpu.memory_space<vmem>>, vector<1x8x256xf32>
    %c0_2 = arith.constant 0 : index
    %c0_3 = arith.constant 0 : index
    %c0_4 = arith.constant 0 : index
    %1 = vector.load %arg10[%c0_2, %c0_3, %c0_4] : memref<1x8x256xf32, #tpu.memory_space<vmem>>, vector<1x8x256xf32>
    %c0_5 = arith.constant 0 : index
    %c0_6 = arith.constant 0 : index
    %2 = vector.load %arg1[%c0_5, %c0_6] : memref<16x32xf32, #tpu.memory_space<vmem>>, vector<16x32xf32>
    %c0_7 = arith.constant 0 : index
    %c0_8 = arith.constant 0 : index
    %3 = vector.load %arg2[%c0_7, %c0_8] : memref<1x16xf32, #tpu.memory_space<vmem>>, vector<1x16xf32>
    %c0_9 = arith.constant 0 : index
    %c0_10 = arith.constant 0 : index
    %4 = vector.load %arg3[%c0_9, %c0_10] : memref<2x16xf32, #tpu.memory_space<vmem>>, vector<2x16xf32>
    %c0_11 = arith.constant 0 : index
    %c0_12 = arith.constant 0 : index
    %5 = vector.load %arg4[%c0_11, %c0_12] : memref<1x2xf32, #tpu.memory_space<vmem>>, vector<1x2xf32>
    %cst = arith.constant dense<0xFF800000> : vector<1x8xf32>
    %6 = vector.multi_reduction <maximumf>, %0, %cst [2] : vector<1x8x256xf32> to vector<1x8xf32>
    %cst_13 = arith.constant dense<0xFF800000> : vector<1x8xf32>
    %7 = vector.multi_reduction <maximumf>, %1, %cst_13 [2] : vector<1x8x256xf32> to vector<1x8xf32>
    %cst_14 = arith.constant dense<0.000000e+00> : vector<1x8xf32>
    %8 = vector.multi_reduction <add>, %0, %cst_14 [2] : vector<1x8x256xf32> to vector<1x8xf32>
    %cst_15 = arith.constant 3.906250e-03 : f32
    %9 = vector.broadcast %cst_15 : f32 to vector<1x8xf32>
    %10 = arith.mulf %8, %9 : vector<1x8xf32>
    %cst_16 = arith.constant dense<0.000000e+00> : vector<1x8xf32>
    %11 = vector.multi_reduction <add>, %1, %cst_16 [2] : vector<1x8x256xf32> to vector<1x8xf32>
    %cst_17 = arith.constant 3.906250e-03 : f32
    %12 = vector.broadcast %cst_17 : f32 to vector<1x8xf32>
    %13 = arith.mulf %11, %12 : vector<1x8xf32>
    %14 = tpu.concatenate %6, %7, %10, %13 in 1 : vector<1x8xf32>, vector<1x8xf32>, vector<1x8xf32>, vector<1x8xf32> -> vector<1x32xf32>
    %15 = vector.shape_cast %14 : vector<1x32xf32> to vector<1x1x32xf32>
    %16 = vector.shape_cast %2 : vector<16x32xf32> to vector<1x16x32xf32>
    %17 = vector.broadcast %15 : vector<1x1x32xf32> to vector<1x16x32xf32>
    %18 = arith.mulf %17, %16 : vector<1x16x32xf32>
    %cst_18 = arith.constant dense<0.000000e+00> : vector<1x16xf32>
    %19 = vector.multi_reduction <add>, %18, %cst_18 [2] : vector<1x16x32xf32> to vector<1x16xf32>
    %20 = arith.addf %19, %3 : vector<1x16xf32>
    %cst_19 = arith.constant 0.000000e+00 : f32
    %21 = vector.broadcast %cst_19 : f32 to vector<1x16xf32>
    %22 = arith.maximumf %20, %21 : vector<1x16xf32>
    %23 = vector.shape_cast %22 : vector<1x16xf32> to vector<1x1x16xf32>
    %24 = vector.shape_cast %4 : vector<2x16xf32> to vector<1x2x16xf32>
    %25 = vector.broadcast %23 : vector<1x1x16xf32> to vector<1x2x16xf32>
    %26 = arith.mulf %25, %24 : vector<1x2x16xf32>
    %cst_20 = arith.constant dense<0.000000e+00> : vector<1x2xf32>
    %27 = vector.multi_reduction <add>, %26, %cst_20 [2] : vector<1x2x16xf32> to vector<1x2xf32>
    %28 = arith.addf %27, %5 : vector<1x2xf32>
    %29 = math.tanh %28 : vector<1x2xf32>
    %cst_21 = arith.constant 0.000000e+00 : f32
    %30 = vector.broadcast %cst_21 : f32 to vector<1x2xf32>
    %31 = arith.maximumf %29, %30 : vector<1x2xf32>
    %32 = vector.shape_cast %31 : vector<1x2xf32> to vector<1x1x2xf32>
    %c0_22 = arith.constant 0 : index
    %c0_23 = arith.constant 0 : index
    %c0_24 = arith.constant 0 : index
    %33 = vector.load %arg13[%c0_22, %c0_23, %c0_24] : memref<1x1x2xf32, #tpu.memory_space<vmem>>, vector<1x1x2xf32>
    tpu.vector_store %arg13[%c0_22, %c0_23, %c0_24], %32 {strides = array<i32>} : memref<1x1x2xf32, #tpu.memory_space<vmem>>, vector<1x1x2xf32>,
    %cst_25 = arith.constant dense<0.000000e+00> : vector<1x8xf32>
    %34 = vector.multi_reduction <add>, %0, %cst_25 [2] : vector<1x8x256xf32> to vector<1x8xf32>
    %35 = vector.shape_cast %34 : vector<1x8xf32> to vector<1x8x1xf32>
    %cst_26 = arith.constant 3.906250e-03 : f32
    %36 = vector.broadcast %cst_26 : f32 to vector<1x8x1xf32>
    %37 = arith.mulf %35, %36 : vector<1x8x1xf32>
    %cst_27 = arith.constant 0.000000e+00 : f32
    %38 = vector.broadcast %cst_27 : f32 to vector<1x1x1xf32>
    %39 = tpu.concatenate %38, %37, %38 in 1 : vector<1x1x1xf32>, vector<1x8x1xf32>, vector<1x1x1xf32> -> vector<1x10x1xf32>
    %c0_28 = arith.constant 0 : index
    %40 = memref.load %arg5[%c0_28] : memref<3xf32, #tpu.memory_space<smem>>
    %41 = vector.extract_strided_slice %39 {offsets = [0, 0, 0], sizes = [1, 8, 1], strides = [1, 1, 1]} : vector<1x10x1xf32> to vector<1x8x1xf32>
    %42 = vector.broadcast %40 : f32 to vector<1x8x1xf32>
    %43 = arith.mulf %42, %41 : vector<1x8x1xf32>
    %c1 = arith.constant 1 : index
    %44 = memref.load %arg5[%c1] : memref<3xf32, #tpu.memory_space<smem>>
    %45 = vector.broadcast %44 : f32 to vector<1x8x1xf32>
    %46 = arith.mulf %45, %37 : vector<1x8x1xf32>
    %47 = arith.addf %43, %46 : vector<1x8x1xf32>
    %c2 = arith.constant 2 : index
    %48 = memref.load %arg5[%c2] : memref<3xf32, #tpu.memory_space<smem>>
    %49 = vector.extract_strided_slice %39 {offsets = [0, 2, 0], sizes = [1, 8, 1], strides = [1, 1, 1]} : vector<1x10x1xf32> to vector<1x8x1xf32>
    %50 = vector.broadcast %48 : f32 to vector<1x8x1xf32>
    %51 = arith.mulf %50, %49 : vector<1x8x1xf32>
    %52 = arith.addf %47, %51 : vector<1x8x1xf32>
    %c0_29 = arith.constant 0 : index
    %53 = memref.load %arg6[%c0_29] : memref<1xf32, #tpu.memory_space<smem>>
    %54 = vector.broadcast %53 : f32 to vector<1x8x1xf32>
    %55 = arith.addf %52, %54 : vector<1x8x1xf32>
    %56 = arith.negf %55 : vector<1x8x1xf32>
    %57 = math.exp %56 : vector<1x8x1xf32>
    %cst_30 = arith.constant 1.000000e+00 : f32
    %58 = vector.broadcast %cst_30 : f32 to vector<1x8x1xf32>
    %59 = arith.addf %58, %57 : vector<1x8x1xf32>
    %60 = arith.divf %58, %59 : vector<1x8x1xf32>
    %61 = vector.broadcast %60 : vector<1x8x1xf32> to vector<1x8x256xf32>
    %62 = arith.mulf %0, %61 : vector<1x8x256xf32>
    %c0_31 = arith.constant 0 : index
    %c0_32 = arith.constant 0 : index
    %c0_33 = arith.constant 0 : index
    %63 = vector.load %arg11[%c0_31, %c0_32, %c0_33] : memref<1x8x256xf32, #tpu.memory_space<vmem>>, vector<1x8x256xf32>
    tpu.vector_store %arg11[%c0_31, %c0_32, %c0_33], %62 {strides = array<i32>} : memref<1x8x256xf32, #tpu.memory_space<vmem>>, vector<1x8x256xf32>,
    %cst_34 = arith.constant dense<0.000000e+00> : vector<1x8xf32>
    %64 = vector.multi_reduction <add>, %1, %cst_34 [2] : vector<1x8x256xf32> to vector<1x8xf32>
    %65 = vector.shape_cast %64 : vector<1x8xf32> to vector<1x8x1xf32>
    %cst_35 = arith.constant 3.906250e-03 : f32
    %66 = vector.broadcast %cst_35 : f32 to vector<1x8x1xf32>
    %67 = arith.mulf %65, %66 : vector<1x8x1xf32>
    %cst_36 = arith.constant 0.000000e+00 : f32
    %68 = vector.broadcast %cst_36 : f32 to vector<1x1x1xf32>
    %69 = tpu.concatenate %68, %67, %68 in 1 : vector<1x1x1xf32>, vector<1x8x1xf32>, vector<1x1x1xf32> -> vector<1x10x1xf32>
    %c0_37 = arith.constant 0 : index
    %70 = memref.load %arg7[%c0_37] : memref<3xf32, #tpu.memory_space<smem>>
    %71 = vector.extract_strided_slice %69 {offsets = [0, 0, 0], sizes = [1, 8, 1], strides = [1, 1, 1]} : vector<1x10x1xf32> to vector<1x8x1xf32>
    %72 = vector.broadcast %70 : f32 to vector<1x8x1xf32>
    %73 = arith.mulf %72, %71 : vector<1x8x1xf32>
    %c1_38 = arith.constant 1 : index
    %74 = memref.load %arg7[%c1_38] : memref<3xf32, #tpu.memory_space<smem>>
    %75 = vector.broadcast %74 : f32 to vector<1x8x1xf32>
    %76 = arith.mulf %75, %67 : vector<1x8x1xf32>
    %77 = arith.addf %73, %76 : vector<1x8x1xf32>
    %c2_39 = arith.constant 2 : index
    %78 = memref.load %arg7[%c2_39] : memref<3xf32, #tpu.memory_space<smem>>
    %79 = vector.extract_strided_slice %69 {offsets = [0, 2, 0], sizes = [1, 8, 1], strides = [1, 1, 1]} : vector<1x10x1xf32> to vector<1x8x1xf32>
    %80 = vector.broadcast %78 : f32 to vector<1x8x1xf32>
    %81 = arith.mulf %80, %79 : vector<1x8x1xf32>
    %82 = arith.addf %77, %81 : vector<1x8x1xf32>
    %c0_40 = arith.constant 0 : index
    %83 = memref.load %arg8[%c0_40] : memref<1xf32, #tpu.memory_space<smem>>
    %84 = vector.broadcast %83 : f32 to vector<1x8x1xf32>
    %85 = arith.addf %82, %84 : vector<1x8x1xf32>
    %86 = arith.negf %85 : vector<1x8x1xf32>
    %87 = math.exp %86 : vector<1x8x1xf32>
    %cst_41 = arith.constant 1.000000e+00 : f32
    %88 = vector.broadcast %cst_41 : f32 to vector<1x8x1xf32>
    %89 = arith.addf %88, %87 : vector<1x8x1xf32>
    %90 = arith.divf %88, %89 : vector<1x8x1xf32>
    %91 = vector.broadcast %90 : vector<1x8x1xf32> to vector<1x8x256xf32>
    %92 = arith.mulf %1, %91 : vector<1x8x256xf32>
    %c0_42 = arith.constant 0 : index
    %c0_43 = arith.constant 0 : index
    %c0_44 = arith.constant 0 : index
    %93 = vector.load %arg12[%c0_42, %c0_43, %c0_44] : memref<1x8x256xf32, #tpu.memory_space<vmem>>, vector<1x8x256xf32>
    tpu.vector_store %arg12[%c0_42, %c0_43, %c0_44], %92 {strides = array<i32>} : memref<1x8x256xf32, #tpu.memory_space<vmem>>, vector<1x8x256xf32>,
    return
  }
  func.func @transform_0(%arg0: i32) -> (i32, i32) {
    %c0_i32 = arith.constant 0 : i32
    %c0_i32_0 = arith.constant 0 : i32
    %c0_i32_1 = arith.constant 0 : i32
    return %c0_i32, %c0_i32_0 : i32, i32
  }
  func.func @transform_1(%arg0: i32) -> (i32, i32) {
    %c0_i32 = arith.constant 0 : i32
    %c0_i32_0 = arith.constant 0 : i32
    %c0_i32_1 = arith.constant 0 : i32
    return %c0_i32, %c0_i32_0 : i32, i32
  }
  func.func @transform_2(%arg0: i32) -> (i32, i32) {
    %c0_i32 = arith.constant 0 : i32
    %c0_i32_0 = arith.constant 0 : i32
    %c0_i32_1 = arith.constant 0 : i32
    return %c0_i32, %c0_i32_0 : i32, i32
  }
  func.func @transform_3(%arg0: i32) -> (i32, i32) {
    %c0_i32 = arith.constant 0 : i32
    %c0_i32_0 = arith.constant 0 : i32
    %c0_i32_1 = arith.constant 0 : i32
    return %c0_i32, %c0_i32_0 : i32, i32
  }
  func.func @transform_4(%arg0: i32) -> i32 {
    %c0_i32 = arith.constant 0 : i32
    %c0_i32_0 = arith.constant 0 : i32
    return %c0_i32 : i32
  }
  func.func @transform_5(%arg0: i32) -> i32 {
    %c0_i32 = arith.constant 0 : i32
    %c0_i32_0 = arith.constant 0 : i32
    return %c0_i32 : i32
  }
  func.func @transform_6(%arg0: i32) -> i32 {
    %c0_i32 = arith.constant 0 : i32
    %c0_i32_0 = arith.constant 0 : i32
    return %c0_i32 : i32
  }
  func.func @transform_7(%arg0: i32) -> i32 {
    %c0_i32 = arith.constant 0 : i32
    %c0_i32_0 = arith.constant 0 : i32
    return %c0_i32 : i32
  }
  func.func @transform_8(%arg0: i32) -> (i32, i32, i32) {
    %c0_i32 = arith.constant 0 : i32
    %c0_i32_0 = arith.constant 0 : i32
    %c0_i32_1 = arith.constant 0 : i32
    return %arg0, %c0_i32, %c0_i32_0 : i32, i32, i32
  }
  func.func @transform_9(%arg0: i32) -> (i32, i32, i32) {
    %c0_i32 = arith.constant 0 : i32
    %c0_i32_0 = arith.constant 0 : i32
    %c0_i32_1 = arith.constant 0 : i32
    return %arg0, %c0_i32, %c0_i32_0 : i32, i32, i32
  }
  func.func @transform_10(%arg0: i32) -> (i32, i32, i32) {
    %c0_i32 = arith.constant 0 : i32
    %c0_i32_0 = arith.constant 0 : i32
    %c0_i32_1 = arith.constant 0 : i32
    return %arg0, %c0_i32, %c0_i32_0 : i32, i32, i32
  }
  func.func @transform_11(%arg0: i32) -> (i32, i32, i32) {
    %c0_i32 = arith.constant 0 : i32
    %c0_i32_0 = arith.constant 0 : i32
    %c0_i32_1 = arith.constant 0 : i32
    return %arg0, %c0_i32, %c0_i32_0 : i32, i32, i32
  }
  func.func @transform_12(%arg0: i32) -> (i32, i32, i32) {
    %c0_i32 = arith.constant 0 : i32
    %c0_i32_0 = arith.constant 0 : i32
    %c0_i32_1 = arith.constant 0 : i32
    return %arg0, %c0_i32, %c0_i32_0 : i32, i32, i32
  }
}

</mosaic_0001>

<llo_original>
// kernel: tpu_custom_call.1
$region0: #{tpu_custom_call.1}
  #allocation0 [shape = 'u32[]', space=smem, size = 0x4, offset = 0x4, fixed_abs, tag = 'smem constant byte address 0x4 - core index']
  #allocation1 [shape = 'u32[144,128]{1,0:T(1,128)}', space=vmem, size = 0x12000, scoped, tag = 'internal scratch']
  #allocation2 [shape = 'f32[1]{0:T(128)S(6)}', space=smem, size = 0x200, scoped, tag = 'scoped memory for tpu_custom_call.1']
  #allocation3 [shape = 'f32[1]{0:T(128)S(6)}', space=smem, size = 0x200, scoped, tag = 'scoped memory for tpu_custom_call.1']
  %s0 = inlined_call_operand.hbm [shape: f32[16,32], index: 0, kind: input, shape index: {}]
  %s1 = inlined_call_operand.hbm [shape: f32[1,16], index: 1, kind: input, shape index: {}]
  %s2 = inlined_call_operand.vmem [shape: f32[2,16], index: 2, kind: input, shape index: {}]
  %s3 = inlined_call_operand.hbm [shape: f32[1,2], index: 3, kind: input, shape index: {}]
  %s4 = inlined_call_operand.hbm [shape: f32[3], index: 4, kind: input, shape index: {}]
  %s5 = inlined_call_operand.<no memory space> [shape: f32[1], index: 5, kind: input, shape index: {}]
  %s6 = inlined_call_operand.hbm [shape: f32[3], index: 6, kind: input, shape index: {}]
  %s7 = inlined_call_operand.<no memory space> [shape: f32[1], index: 7, kind: input, shape index: {}]
  %s8 = inlined_call_operand.hbm [shape: f32[2,8,256], index: 8, kind: input, shape index: {}]
  %s9 = inlined_call_operand.vmem [shape: f32[2,8,256], index: 9, kind: input, shape index: {}]
  %s10 = inlined_call_operand.hbm [shape: f32[2,8,256], index: 10, kind: output, shape index: {0}]
  %s11 = inlined_call_operand.hbm [shape: f32[2,8,256], index: 11, kind: output, shape index: {1}]
  %s12 = inlined_call_operand.hbm [shape: f32[2,1,2], index: 12, kind: output, shape index: {2}]
  %13 = xla_tuple %s10, %s11, %s12
  %s14 = sld [smem:[#allocation0]]
  $region113: #{tpu_custom_call.1} parent=0
    _
  %s16 = ssub.s32 1, %s14
  %s17 = scalar_select 0, %s16, %s14
  %18 = sst [smem:[#allocation2]] %s5
  %19 = sst [smem:[#allocation3]] %s7
  $region1: #{tpu_custom_call.1} parent=0
    #allocation4 [shape = 'u8[8192]{0}', space=vmem, size = 0x2000, scoped, tag = 'input window, operand 0, single buffered']
    #allocation5 [shape = 's32[2]{0}', space=sflag, size = 0x8, scoped, tag = 'scoped memory for tpu_custom_call.1']
    #allocation6 [shape = 's32[2]{0}', space=sflag, size = 0x8, scoped, tag = 'scoped memory for tpu_custom_call.1']
    #allocation7 [shape = 's32[2]{0}', space=sflag, size = 0x8, scoped, tag = 'scoped memory for tpu_custom_call.1']
    #allocation8 [shape = 'u8[512]{0}', space=vmem, size = 0x400, scoped, tag = 'input window, operand 1, single buffered']
    #allocation9 [shape = 's32[1]{0}', space=sflag, size = 0x4, scoped, tag = 'scoped memory for tpu_custom_call.1']
    #allocation10 [shape = 'u8[512]{0}', space=vmem, size = 0x400, scoped, tag = 'input window, operand 3, single buffered']
    #allocation11 [shape = 'u8[512]{0}', space=smem, size = 0x200, scoped, tag = 'input window, operand 4, single buffered']
    #allocation12 [shape = 'u8[512]{0}', space=smem, size = 0x200, scoped, tag = 'input window, operand 6, single buffered']
    #allocation13 [shape = 's32[1]{0}', space=sflag, size = 0x4, scoped, tag = 'scoped memory for tpu_custom_call.1']
    #allocation14 [shape = 'u8[16384]{0}', space=vmem, size = 0x4000, scoped, tag = 'input window, operand 8']
    #allocation15 [shape = 's32[2]{0}', space=sflag, size = 0x8, scoped, tag = 'scoped memory for tpu_custom_call.1']
    #allocation16 [shape = 'u8[16384]{0}', space=vmem, size = 0x4000, scoped, tag = 'output window, operand 0']
    #allocation17 [shape = 'u8[16384]{0}', space=vmem, size = 0x4000, scoped, tag = 'output window, operand 1']
    #allocation18 [shape = 's32[2]{0}', space=sflag, size = 0x8, scoped, tag = 'scoped memory for tpu_custom_call.1']
    #allocation19 [shape = 'u8[1024]{0}', space=vmem, size = 0x400, scoped, tag = 'output window, operand 2']
    %20 = vsyncpa [#allocation5], 0
    %21 = vsyncpa [#allocation9], 0
    %22 = vsyncpa [#allocation7], 0
    %23 = vsyncpa [#allocation13], 0
    %24 = vsyncpa [#allocation15], 0
    %s25 = scalar_lea.sflag [#allocation15], 1
    %26 = vsyncpa %s25, 0
    %27 = vsyncpa [#allocation6], 0
    %s28 = scalar_lea.sflag [#allocation6], 1
    %29 = vsyncpa %s28, 0
    %30 = vsyncpa [#allocation18], 0
    %s31 = scalar_lea.sflag [#allocation18], 1
    %32 = vsyncpa %s31, 0
    loop: start=0, step=1, limit=4
    $region2: #{tpu_custom_call.1} parent=1 // loop_pre_header
      _
    $region3: #{tpu_custom_call.1} parent=1 // loop_header
      %s34 = sphi 0, %s38
      %p35 = scmp.ge.s32.totalorder %s34, 4
      %s42 = sphi 0, %s42
      %s44 = sphi 0, %s42
      %s45 = sphi 0, %s44
      %s59 = sphi 0, %s45
      %s63 = sphi 0, %s63
      %s65 = sphi 0, %s63
      %s66 = sphi 0, %s65
      %s80 = sphi 0, %s66
      %s84 = sphi 0, %s84
      %s86 = sphi 0, %s84
      %s87 = sphi 0, %s86
      %s101 = sphi 0, %s87
      %s105 = sphi 0, %s105
      %s107 = sphi 0, %s105
      %s108 = sphi 0, %s107
      %s122 = sphi 0, %s108
      %s126 = sphi 0, %s126
      %s128 = sphi 0, %s126
      %s129 = sphi 0, %s128
      %s143 = sphi 0, %s129
      %s147 = sphi 0, %s147
      %s149 = sphi 0, %s147
      %s150 = sphi 0, %s149
      %s164 = sphi 0, %s150
      %s168 = sphi 0, %s168
      %s170 = sphi 0, %s168
      %s171 = sphi 0, %s170
      %s185 = sphi 0, %s171
      %s189 = sphi 0, %s189
      %s191 = sphi 0, %s189
      %s192 = sphi 0, %s191
      %s206 = sphi 0, %s192
      %s212 = sphi 0, %s214
      %s215 = sphi 0, %s212
      %s216 = sphi 0, %s215
      %s232 = sphi 0, %s216
      %s238 = sphi 0, %s240
      %s241 = sphi 0, %s238
      %s242 = sphi 0, %s241
      %s258 = sphi 0, %s242
      %s264 = sphi 0, %s266
      %s267 = sphi 0, %s264
      %s268 = sphi 0, %s267
      %s284 = sphi 0, %s268
      %s290 = sphi 0, %s292
      %s293 = sphi 0, %s290
      %s294 = sphi 0, %s293
      %s310 = sphi 0, %s294
      %s316 = sphi 0, %s318
      %s319 = sphi 0, %s316
      %s320 = sphi 0, %s319
      %s336 = sphi 0, %s320
    $region4: #{tpu_custom_call.1} parent=1 // loop_header_branch
      %37 = sbr.rel (%p35) target = $region8
    $region5: #{tpu_custom_call.1} parent=1 // loop_body
      %s39 = ssub.s32 %s34, 1
      %s40 = ssub.s32 %s34, 2
      %s41 = sadd.s32 %s34, 1
      %s43 = sadd.s32 %s42, 1
      %p46 = scmp.eq.s32.totalorder %s34, 1
      %p47 = scmp.ne.s32.totalorder %s42, %s44
      %p48 = scmp.eq.s32.totalorder %s34, 0
      %p49 = por %p47, %p48
      %p50 = scmp.ne.s32.totalorder %s42, %s44
      %p51 = scmp.eq.s32.totalorder %s39, 1
      %p52 = por %p50, %p51
      %p53 = scmp.ne.s32.totalorder %s44, %s45
      %p54 = scmp.eq.s32.totalorder %s39, 0
      %p55 = por %p53, %p54
      %p56 = scmp.ne.s32.totalorder %s44, %s45
      %p57 = scmp.eq.s32.totalorder %s40, 1
      %p58 = por %p56, %p57
      %p60 = scmp.ne.s32.totalorder %s45, %s59
      %p61 = scmp.eq.s32.totalorder %s40, 0
      %p62 = por %p60, %p61
      %s64 = sadd.s32 %s63, 1
      %p67 = scmp.eq.s32.totalorder %s34, 1
      %p68 = scmp.ne.s32.totalorder %s63, %s65
      %p69 = scmp.eq.s32.totalorder %s34, 0
      %p70 = por %p68, %p69
      %p71 = scmp.ne.s32.totalorder %s63, %s65
      %p72 = scmp.eq.s32.totalorder %s39, 1
      %p73 = por %p71, %p72
      %p74 = scmp.ne.s32.totalorder %s65, %s66
      %p75 = scmp.eq.s32.totalorder %s39, 0
      %p76 = por %p74, %p75
      %p77 = scmp.ne.s32.totalorder %s65, %s66
      %p78 = scmp.eq.s32.totalorder %s40, 1
      %p79 = por %p77, %p78
      %p81 = scmp.ne.s32.totalorder %s66, %s80
      %p82 = scmp.eq.s32.totalorder %s40, 0
      %p83 = por %p81, %p82
      %s85 = sadd.s32 %s84, 1
      %p88 = scmp.eq.s32.totalorder %s34, 1
      %p89 = scmp.ne.s32.totalorder %s84, %s86
      %p90 = scmp.eq.s32.totalorder %s34, 0
      %p91 = por %p89, %p90
      %p92 = scmp.ne.s32.totalorder %s84, %s86
      %p93 = scmp.eq.s32.totalorder %s39, 1
      %p94 = por %p92, %p93
      %p95 = scmp.ne.s32.totalorder %s86, %s87
      %p96 = scmp.eq.s32.totalorder %s39, 0
      %p97 = por %p95, %p96
      %p98 = scmp.ne.s32.totalorder %s86, %s87
      %p99 = scmp.eq.s32.totalorder %s40, 1
      %p100 = por %p98, %p99
      %p102 = scmp.ne.s32.totalorder %s87, %s101
      %p103 = scmp.eq.s32.totalorder %s40, 0
      %p104 = por %p102, %p103
      %s106 = sadd.s32 %s105, 1
      %p109 = scmp.eq.s32.totalorder %s34, 1
      %p110 = scmp.ne.s32.totalorder %s105, %s107
      %p111 = scmp.eq.s32.totalorder %s34, 0
      %p112 = por %p110, %p111
      %p113 = scmp.ne.s32.totalorder %s105, %s107
      %p114 = scmp.eq.s32.totalorder %s39, 1
      %p115 = por %p113, %p114
      %p116 = scmp.ne.s32.totalorder %s107, %s108
      %p117 = scmp.eq.s32.totalorder %s39, 0
      %p118 = por %p116, %p117
      %p119 = scmp.ne.s32.totalorder %s107, %s108
      %p120 = scmp.eq.s32.totalorder %s40, 1
      %p121 = por %p119, %p120
      %p123 = scmp.ne.s32.totalorder %s108, %s122
      %p124 = scmp.eq.s32.totalorder %s40, 0
      %p125 = por %p123, %p124
      %s127 = sadd.s32 %s126, 1
      %p130 = scmp.eq.s32.totalorder %s34, 1
      %p131 = scmp.ne.s32.totalorder %s126, %s128
      %p132 = scmp.eq.s32.totalorder %s34, 0
      %p133 = por %p131, %p132
      %p134 = scmp.ne.s32.totalorder %s126, %s128
      %p135 = scmp.eq.s32.totalorder %s39, 1
      %p136 = por %p134, %p135
      %p137 = scmp.ne.s32.totalorder %s128, %s129
      %p138 = scmp.eq.s32.totalorder %s39, 0
      %p139 = por %p137, %p138
      %p140 = scmp.ne.s32.totalorder %s128, %s129
      %p141 = scmp.eq.s32.totalorder %s40, 1
      %p142 = por %p140, %p141
      %p144 = scmp.ne.s32.totalorder %s129, %s143
      %p145 = scmp.eq.s32.totalorder %s40, 0
      %p146 = por %p144, %p145
      %s148 = sadd.s32 %s147, 1
      %p151 = scmp.eq.s32.totalorder %s34, 1
      %p152 = scmp.ne.s32.totalorder %s147, %s149
      %p153 = scmp.eq.s32.totalorder %s34, 0
      %p154 = por %p152, %p153
      %p155 = scmp.ne.s32.totalorder %s147, %s149
      %p156 = scmp.eq.s32.totalorder %s39, 1
      %p157 = por %p155, %p156
      %p158 = scmp.ne.s32.totalorder %s149, %s150
      %p159 = scmp.eq.s32.totalorder %s39, 0
      %p160 = por %p158, %p159
      %p161 = scmp.ne.s32.totalorder %s149, %s150
      %p162 = scmp.eq.s32.totalorder %s40, 1
      %p163 = por %p161, %p162
      %p165 = scmp.ne.s32.totalorder %s150, %s164
      %p166 = scmp.eq.s32.totalorder %s40, 0
      %p167 = por %p165, %p166
      %s169 = sadd.s32 %s168, 1
      %p172 = scmp.eq.s32.totalorder %s34, 1
      %p173 = scmp.ne.s32.totalorder %s168, %s170
      %p174 = scmp.eq.s32.totalorder %s34, 0
      %p175 = por %p173, %p174
      %p176 = scmp.ne.s32.totalorder %s168, %s170
      %p177 = scmp.eq.s32.totalorder %s39, 1
      %p178 = por %p176, %p177
      %p179 = scmp.ne.s32.totalorder %s170, %s171
      %p180 = scmp.eq.s32.totalorder %s39, 0
      %p181 = por %p179, %p180
      %p182 = scmp.ne.s32.totalorder %s170, %s171
      %p183 = scmp.eq.s32.totalorder %s40, 1
      %p184 = por %p182, %p183
      %p186 = scmp.ne.s32.totalorder %s171, %s185
      %p187 = scmp.eq.s32.totalorder %s40, 0
      %p188 = por %p186, %p187
      %s190 = sadd.s32 %s189, 1
      %p193 = scmp.eq.s32.totalorder %s34, 1
      %p194 = scmp.ne.s32.totalorder %s189, %s191
      %p195 = scmp.eq.s32.totalorder %s34, 0
      %p196 = por %p194, %p195
      %p197 = scmp.ne.s32.totalorder %s189, %s191
      %p198 = scmp.eq.s32.totalorder %s39, 1
      %p199 = por %p197, %p198
      %p200 = scmp.ne.s32.totalorder %s191, %s192
      %p201 = scmp.eq.s32.totalorder %s39, 0
      %p202 = por %p200, %p201
      %p203 = scmp.ne.s32.totalorder %s191, %s192
      %p204 = scmp.eq.s32.totalorder %s40, 1
      %p205 = por %p203, %p204
      %p207 = scmp.ne.s32.totalorder %s192, %s206
      %p208 = scmp.eq.s32.totalorder %s40, 0
      %p209 = por %p207, %p208
      %s210 = ssub.s32 %s34, %s41
      %p211 = scmp.eq.s32.totalorder %s210, 0
      %s213 = sadd.s32 %s212, 1
      %s214 = scalar_select %p211, %s212, %s213
      %p217 = pneg %p211
      %p218 = scmp.eq.s32.totalorder %s34, 1
      %p219 = por %p217, %p218
      %p220 = scmp.ne.s32.totalorder %s212, %s215
      %p221 = scmp.eq.s32.totalorder %s34, 0
      %p222 = por %p220, %p221
      %p223 = scmp.ne.s32.totalorder %s212, %s215
      %p224 = scmp.eq.s32.totalorder %s39, 1
      %p225 = por %p223, %p224
      %p226 = scmp.ne.s32.totalorder %s215, %s216
      %p227 = scmp.eq.s32.totalorder %s39, 0
      %p228 = por %p226, %p227
      %p229 = scmp.ne.s32.totalorder %s215, %s216
      %p230 = scmp.eq.s32.totalorder %s40, 1
      %p231 = por %p229, %p230
      %p233 = scmp.ne.s32.totalorder %s216, %s232
      %p234 = scmp.eq.s32.totalorder %s40, 0
      %p235 = por %p233, %p234
      %s236 = ssub.s32 %s34, %s41
      %p237 = scmp.eq.s32.totalorder %s236, 0
      %s239 = sadd.s32 %s238, 1
      %s240 = scalar_select %p237, %s238, %s239
      %p243 = pneg %p237
      %p244 = scmp.eq.s32.totalorder %s34, 1
      %p245 = por %p243, %p244
      %p246 = scmp.ne.s32.totalorder %s238, %s241
      %p247 = scmp.eq.s32.totalorder %s34, 0
      %p248 = por %p246, %p247
      %p249 = scmp.ne.s32.totalorder %s238, %s241
      %p250 = scmp.eq.s32.totalorder %s39, 1
      %p251 = por %p249, %p250
      %p252 = scmp.ne.s32.totalorder %s241, %s242
      %p253 = scmp.eq.s32.totalorder %s39, 0
      %p254 = por %p252, %p253
      %p255 = scmp.ne.s32.totalorder %s241, %s242
      %p256 = scmp.eq.s32.totalorder %s40, 1
      %p257 = por %p255, %p256
      %p259 = scmp.ne.s32.totalorder %s242, %s258
      %p260 = scmp.eq.s32.totalorder %s40, 0
      %p261 = por %p259, %p260
      %s262 = ssub.s32 %s34, %s41
      %p263 = scmp.eq.s32.totalorder %s262, 0
      %s265 = sadd.s32 %s264, 1
      %s266 = scalar_select %p263, %s264, %s265
      %p269 = pneg %p263
      %p270 = scmp.eq.s32.totalorder %s34, 1
      %p271 = por %p269, %p270
      %p272 = scmp.ne.s32.totalorder %s264, %s267
      %p273 = scmp.eq.s32.totalorder %s34, 0
      %p274 = por %p272, %p273
      %p275 = scmp.ne.s32.totalorder %s264, %s267
      %p276 = scmp.eq.s32.totalorder %s39, 1
      %p277 = por %p275, %p276
      %p278 = scmp.ne.s32.totalorder %s267, %s268
      %p279 = scmp.eq.s32.totalorder %s39, 0
      %p280 = por %p278, %p279
      %p281 = scmp.ne.s32.totalorder %s267, %s268
      %p282 = scmp.eq.s32.totalorder %s40, 1
      %p283 = por %p281, %p282
      %p285 = scmp.ne.s32.totalorder %s268, %s284
      %p286 = scmp.eq.s32.totalorder %s40, 0
      %p287 = por %p285, %p286
      %s288 = ssub.s32 %s34, %s41
      %p289 = scmp.eq.s32.totalorder %s288, 0
      %s291 = sadd.s32 %s290, 1
      %s292 = scalar_select %p289, %s290, %s291
      %p295 = pneg %p289
      %p296 = scmp.eq.s32.totalorder %s34, 1
      %p297 = por %p295, %p296
      %p298 = scmp.ne.s32.totalorder %s290, %s293
      %p299 = scmp.eq.s32.totalorder %s34, 0
      %p300 = por %p298, %p299
      %p301 = scmp.ne.s32.totalorder %s290, %s293
      %p302 = scmp.eq.s32.totalorder %s39, 1
      %p303 = por %p301, %p302
      %p304 = scmp.ne.s32.totalorder %s293, %s294
      %p305 = scmp.eq.s32.totalorder %s39, 0
      %p306 = por %p304, %p305
      %p307 = scmp.ne.s32.totalorder %s293, %s294
      %p308 = scmp.eq.s32.totalorder %s40, 1
      %p309 = por %p307, %p308
      %p311 = scmp.ne.s32.totalorder %s294, %s310
      %p312 = scmp.eq.s32.totalorder %s40, 0
      %p313 = por %p311, %p312
      %s314 = ssub.s32 %s34, %s41
      %p315 = scmp.eq.s32.totalorder %s314, 0
      %s317 = sadd.s32 %s316, 1
      %s318 = scalar_select %p315, %s316, %s317
      %p321 = pneg %p315
      %p322 = scmp.eq.s32.totalorder %s34, 1
      %p323 = por %p321, %p322
      %p324 = scmp.ne.s32.totalorder %s316, %s319
      %p325 = scmp.eq.s32.totalorder %s34, 0
      %p326 = por %p324, %p325
      %p327 = scmp.ne.s32.totalorder %s316, %s319
      %p328 = scmp.eq.s32.totalorder %s39, 1
      %p329 = por %p327, %p328
      %p330 = scmp.ne.s32.totalorder %s319, %s320
      %p331 = scmp.eq.s32.totalorder %s39, 0
      %p332 = por %p330, %p331
      %p333 = scmp.ne.s32.totalorder %s319, %s320
      %p334 = scmp.eq.s32.totalorder %s40, 1
      %p335 = por %p333, %p334
      %p337 = scmp.ne.s32.totalorder %s320, %s336
      %p338 = scmp.eq.s32.totalorder %s40, 0
      %p339 = por %p337, %p338
      %p340 = scmp.le.s32.totalorder 1, %s34
      %p341 = scmp.lt.s32.totalorder %s34, 3
      %p342 = pnand %p340, %p341
      %p343 = pneg %p342
      // Predicated region
      $region9: #{tpu_custom_call.1} parent=5 // pred_check
        _
      $region10: #{tpu_custom_call.1} parent=5 // pred_check_branch
        %345 = sbr.rel (%p342) target = $region12
      $region11: #{tpu_custom_call.1} parent=5 // pred_region
        %s346 = ssub.s32 %s34, 1
        // Predicated region
        $region13: #{tpu_custom_call.1} parent=11 // pred_check
          %p347 = pneg %p55
        $region14: #{tpu_custom_call.1} parent=11 // pred_check_branch
          %349 = sbr.rel (%p347) target = $region16
        $region15: #{tpu_custom_call.1} parent=11 // pred_region
          %s351 = ssub.s32 256, 256
          %352 = vsyncadd [#allocation5], %s351
          %s353 = sshll.u32 [#allocation4], 4
          %s354 = int_to_ptr.vmem [resolvable:$true] %s353
          %359 = dma.hbm_to_vmem [thread:$0]  %s0, 256, %s354, [#allocation5], 128, 128, 8
        $region16: #{tpu_custom_call.1} parent=11 // pred_fallthru
          _
        // Predicated region
        $region17: #{tpu_custom_call.1} parent=11 // pred_check
          %p360 = pneg %p76
        $region18: #{tpu_custom_call.1} parent=11 // pred_check_branch
          %362 = sbr.rel (%p360) target = $region20
        $region19: #{tpu_custom_call.1} parent=11 // pred_region
          %s364 = ssub.s32 16, 16
          %365 = vsyncadd [#allocation9], %s364
          %s367 = sshll.u32 [#allocation8], 4
          %s368 = int_to_ptr.vmem [resolvable:$true] %s367
          %370 = dma.hbm_to_vmem [thread:$0]  %s1, 16, %s368, [#allocation9]
        $region20: #{tpu_custom_call.1} parent=11 // pred_fallthru
          _
        // Predicated region
        $region21: #{tpu_custom_call.1} parent=11 // pred_check
          %p371 = pneg %p97
        $region22: #{tpu_custom_call.1} parent=11 // pred_check_branch
          %373 = sbr.rel (%p371) target = $region24
        $region23: #{tpu_custom_call.1} parent=11 // pred_region
          _
        $region24: #{tpu_custom_call.1} parent=11 // pred_fallthru
          _
        // Predicated region
        $region25: #{tpu_custom_call.1} parent=11 // pred_check
          %p374 = pneg %p118
        $region26: #{tpu_custom_call.1} parent=11 // pred_check_branch
          %376 = sbr.rel (%p374) target = $region28
        $region27: #{tpu_custom_call.1} parent=11 // pred_region
          %s378 = ssub.s32 16, 16
          %379 = vsyncadd [#allocation9], %s378
          %s381 = sshll.u32 [#allocation10], 4
          %s382 = int_to_ptr.vmem [resolvable:$true] %s381
          %384 = dma.hbm_to_vmem [thread:$0]  %s3, 16, %s382, [#allocation9]
        $region28: #{tpu_custom_call.1} parent=11 // pred_fallthru
          _
        // Predicated region
        $region29: #{tpu_custom_call.1} parent=11 // pred_check
          %p385 = pneg %p139
        $region30: #{tpu_custom_call.1} parent=11 // pred_check_branch
          %387 = sbr.rel (%p385) target = $region32
        $region31: #{tpu_custom_call.1} parent=11 // pred_region
          %s389 = ssub.s32 16, 16
          %390 = vsyncadd [#allocation7], %s389
          %393 = dma.hbm_to_smem %s4, 16, [#allocation11], [#allocation7]
        $region32: #{tpu_custom_call.1} parent=11 // pred_fallthru
          _
        // Predicated region
        $region33: #{tpu_custom_call.1} parent=11 // pred_check
          %p394 = pneg %p160
        $region34: #{tpu_custom_call.1} parent=11 // pred_check_branch
          %396 = sbr.rel (%p394) target = $region36
        $region35: #{tpu_custom_call.1} parent=11 // pred_region
          _
        $region36: #{tpu_custom_call.1} parent=11 // pred_fallthru
          _
        // Predicated region
        $region37: #{tpu_custom_call.1} parent=11 // pred_check
          %p397 = pneg %p181
        $region38: #{tpu_custom_call.1} parent=11 // pred_check_branch
          %399 = sbr.rel (%p397) target = $region40
        $region39: #{tpu_custom_call.1} parent=11 // pred_region
          %s401 = ssub.s32 16, 16
          %402 = vsyncadd [#allocation13], %s401
          %405 = dma.hbm_to_smem %s6, 16, [#allocation12], [#allocation13]
        $region40: #{tpu_custom_call.1} parent=11 // pred_fallthru
          _
        // Predicated region
        $region41: #{tpu_custom_call.1} parent=11 // pred_check
          %p406 = pneg %p202
        $region42: #{tpu_custom_call.1} parent=11 // pred_check_branch
          %408 = sbr.rel (%p406) target = $region44
        $region43: #{tpu_custom_call.1} parent=11 // pred_region
          _
        $region44: #{tpu_custom_call.1} parent=11 // pred_fallthru
          _
      $region12: #{tpu_custom_call.1} parent=5 // pred_fallthru
        _
      %p409 = scmp.lt.s32.totalorder %s34, 2
      // Predicated region
      $region45: #{tpu_custom_call.1} parent=5 // pred_check
        %p410 = pneg %p409
      $region46: #{tpu_custom_call.1} parent=5 // pred_check_branch
        %412 = sbr.rel (%p410) target = $region48
      $region47: #{tpu_custom_call.1} parent=5 // pred_region
        // Predicated region
        $region49: #{tpu_custom_call.1} parent=47 // pred_check
          %p413 = pneg %p222
        $region50: #{tpu_custom_call.1} parent=47 // pred_check_branch
          %415 = sbr.rel (%p413) target = $region52
        $region51: #{tpu_custom_call.1} parent=47 // pred_region
          %s416 = sand.u32 %s212, 1
          %s417 = scalar_lea.sflag [#allocation15], %s416
          %s418 = sand.u32 %s212, 1
          %s419 = smul.addr %s418, 16
          %s420 = scalar_lea.vmem [#allocation14], %s419
          %s422 = ssub.s32 256, 256
          %423 = vsyncadd %s417, %s422
          %s424 = smul.addr %s34, 2
          %s425 = smul.addr %s424, 128
          %s426 = scalar_lea.hbm %s8, %s425
          %s428 = sshll.u32 %s420, 4
          %s429 = int_to_ptr.vmem [resolvable:$true] %s428
          %431 = dma.hbm_to_vmem [thread:$0]  %s426, 256, %s429, %s417
        $region52: #{tpu_custom_call.1} parent=47 // pred_fallthru
          _
        // Predicated region
        $region53: #{tpu_custom_call.1} parent=47 // pred_check
          %p432 = pneg %p248
        $region54: #{tpu_custom_call.1} parent=47 // pred_check_branch
          %434 = sbr.rel (%p432) target = $region56
        $region55: #{tpu_custom_call.1} parent=47 // pred_region
          %p435 = scmp.lt.s32.totalorder %s34, 1
          %s436 = scalar_select %p435, %s34, 1
          %s437 = smul.addr %s436, 2
          %s438 = smul.addr %s437, 8
          %s439 = scalar_lea.vmem %s9, %s438
        $region56: #{tpu_custom_call.1} parent=47 // pred_fallthru
          _
      $region48: #{tpu_custom_call.1} parent=5 // pred_fallthru
        _
      %p440 = scmp.le.s32.totalorder 1, %s34
      %p441 = scmp.lt.s32.totalorder %s34, 3
      %p442 = pnand %p440, %p441
      %p443 = pneg %p442
      // Predicated region
      $region57: #{tpu_custom_call.1} parent=5 // pred_check
        _
      $region58: #{tpu_custom_call.1} parent=5 // pred_check_branch
        %445 = sbr.rel (%p442) target = $region60
      $region59: #{tpu_custom_call.1} parent=5 // pred_region
        %s446 = ssub.s32 %s34, 1
        // Predicated region
        $region61: #{tpu_custom_call.1} parent=59 // pred_check
          %p447 = pneg %p55
        $region62: #{tpu_custom_call.1} parent=59 // pred_check_branch
          %449 = sbr.rel (%p447) target = $region64
        $region63: #{tpu_custom_call.1} parent=59 // pred_region
          %450 = dma.done [#allocation5], 256
        $region64: #{tpu_custom_call.1} parent=59 // pred_fallthru
          _
        // Predicated region
        $region65: #{tpu_custom_call.1} parent=59 // pred_check
          %p451 = pneg %p76
        $region66: #{tpu_custom_call.1} parent=59 // pred_check_branch
          %453 = sbr.rel (%p451) target = $region68
        $region67: #{tpu_custom_call.1} parent=59 // pred_region
          %454 = dma.done [#allocation9], 16
        $region68: #{tpu_custom_call.1} parent=59 // pred_fallthru
          _
        // Predicated region
        $region69: #{tpu_custom_call.1} parent=59 // pred_check
          %p455 = pneg %p118
        $region70: #{tpu_custom_call.1} parent=59 // pred_check_branch
          %457 = sbr.rel (%p455) target = $region72
        $region71: #{tpu_custom_call.1} parent=59 // pred_region
          %458 = dma.done [#allocation9], 16
        $region72: #{tpu_custom_call.1} parent=59 // pred_fallthru
          _
        // Predicated region
        $region73: #{tpu_custom_call.1} parent=59 // pred_check
          %p459 = pneg %p139
        $region74: #{tpu_custom_call.1} parent=59 // pred_check_branch
          %461 = sbr.rel (%p459) target = $region76
        $region75: #{tpu_custom_call.1} parent=59 // pred_region
          %462 = dma.done [#allocation7], 16
        $region76: #{tpu_custom_call.1} parent=59 // pred_fallthru
          _
        // Predicated region
        $region77: #{tpu_custom_call.1} parent=59 // pred_check
          %p463 = pneg %p181
        $region78: #{tpu_custom_call.1} parent=59 // pred_check_branch
          %465 = sbr.rel (%p463) target = $region80
        $region79: #{tpu_custom_call.1} parent=59 // pred_region
          %466 = dma.done [#allocation13], 16
        $region80: #{tpu_custom_call.1} parent=59 // pred_fallthru
          _
        %s467 = sand.u32 %s215, 1
        %s468 = scalar_lea.sflag [#allocation15], %s467
        %s469 = sand.u32 %s215, 1
        %s470 = smul.addr %s469, 16
        %s471 = scalar_lea.vmem [#allocation14], %s470
        // Predicated region
        $region81: #{tpu_custom_call.1} parent=59 // pred_check
          %p472 = pneg %p228
        $region82: #{tpu_custom_call.1} parent=59 // pred_check_branch
          %474 = sbr.rel (%p472) target = $region84
        $region83: #{tpu_custom_call.1} parent=59 // pred_region
          %475 = dma.done %s468, 256
        $region84: #{tpu_custom_call.1} parent=59 // pred_fallthru
          _
        %476 = sfence
        %p477 = pneg %p55
        %p478 = pneg %p52
        %p479 = pneg %p76
        %p480 = pneg %p73
        %p481 = pneg %p97
        %p482 = pneg %p94
        %p483 = pneg %p118
        %p484 = pneg %p115
        %p485 = pneg %p139
        %p486 = pneg %p136
        %p487 = pneg %p160
        %p488 = pneg %p157
        %p489 = pneg %p181
        %p490 = pneg %p178
        %p491 = pneg %p202
        %p492 = pneg %p199
        %s493 = sand.u32 %s215, 1
        %s494 = scalar_lea.sflag [#allocation15], %s493
        %s495 = sand.u32 %s215, 1
        %s496 = smul.addr %s495, 16
        %s497 = scalar_lea.vmem [#allocation14], %s496
        %p498 = pneg %p228
        %p499 = pneg %p225
        %p500 = scmp.lt.s32.totalorder %s39, 1
        %s501 = scalar_select %p500, %s39, 1
        %s502 = smul.addr %s501, 2
        %s503 = smul.addr %s502, 8
        %s504 = scalar_lea.vmem %s9, %s503
        %p505 = pneg %p254
        %p506 = pneg %p251
        %p507 = pneg %p280
        %p508 = pneg %p277
        %s509 = sand.u32 %s267, 1
        %s510 = scalar_lea.sflag [#allocation6], %s509
        %s511 = sand.u32 %s267, 1
        %s512 = smul.addr %s511, 16
        %s513 = scalar_lea.vmem [#allocation16], %s512
        %p514 = pneg %p306
        %p515 = pneg %p303
        %s516 = sand.u32 %s39, 1
        %s517 = scalar_lea.sflag [#allocation18], %s516
        %s518 = sand.u32 %s293, 1
        %s519 = smul.addr %s518, 16
        %s520 = scalar_lea.vmem [#allocation17], %s519
        %p521 = pneg %p332
        %p522 = pneg %p329
        %s523 = sand.u32 %s39, 1
        %s524 = scalar_lea.sflag [#allocation18], %s523
        %s525 = sand.u32 %s319, 1
        %s526 = scalar_lea.vmem [#allocation19], %s525
        %p527 = scmp.lt.s32.totalorder %s39, 1
        %s528 = scalar_select %p527, %s39, 1
        %s529 = smul.addr %s528, 2
        %s530 = smul.addr %s529, 8
        %s531 = scalar_lea.vmem %s9, %s530
        %v532 = vld [vmem:[%s471] sm:$0xff]
        %v533 = vld [vmem:[%s471 + $0x8] sm:$0xff]
        %v534 = vld [vmem:[%s531] sm:$0xff]
        %v535 = vld [vmem:[%s531 + $0x8] sm:$0xff]
        %v536 = vld [vmem:[#allocation4] sm:$0xff]
        %v537 = vld [vmem:[#allocation4 + $0x8] sm:$0xff]
        %v538 = vld [vmem:[#allocation8] sm:$0x1]
        %v539 = vld [vmem:[%s2] sm:$0x3]
        %v540 = vld [vmem:[#allocation10] sm:$0x1]
        %v541 = vmax.f32 %v532, %v533
        %542 = vmax.xlane.f32.xlu0 %v541
        %v543 = vpop.xlane.xlu0 %542
        %v544 = vmax.f32 %v534, %v535
        %545 = vmax.xlane.f32.xlu0 %v544
        %v546 = vpop.xlane.xlu0 %545
        %v547 = vadd.f32 %v532, %v533
        %548 = vadd.xlane.f32.xlu0 %v547
        %v549 = vpop.xlane.xlu0 %548
        %v550 = vmul.f32 %v549, 0.00390625
        %v551 = vadd.f32 %v534, %v535
        %552 = vadd.xlane.f32.xlu0 %v551
        %v553 = vpop.xlane.xlu0 %552
        %v554 = vmul.f32 %v553, 0.00390625
        %v556 = vlaneseq
        %v557 = vand.u32 %v556, 127
        %v558 = vlaneseq
        %v559 = vshrl.u32 %v558, 7
        %v560 = vsub.s32 %v557, %v559
        %v561 = vrot.slane %v543, %v560
        %v564 = vadd.s32 %v557, 4294967288
        %v565 = vlaneseq
        %v566 = vshrl.u32 %v565, 7
        %v567 = vsub.s32 %v564, %v566
        %v568 = vrot.slane %v546, %v567
        %v571 = vadd.s32 %v557, 4294967280
        %v572 = vlaneseq
        %v573 = vshrl.u32 %v572, 7
        %v574 = vsub.s32 %v571, %v573
        %v575 = vrot.slane %v550, %v574
        %v578 = vadd.s32 %v557, 4294967272
        %v579 = vlaneseq
        %v580 = vshrl.u32 %v579, 7
        %v581 = vsub.s32 %v578, %v580
        %v582 = vrot.slane %v554, %v581
        %vm584 = vcmask 64512
        %v585 = vsel %vm584, %v561, %v568
        %vm586 = vcmask 130048
        %v587 = vsel %vm586, %v585, %v575
        %vm588 = vcmask 195584
        %v589 = vsel %vm588, %v587, %v582
        %v590 = vlaneseq
        %v591 = vshrl.u32 %v590, 7
        %v592 = vsub.s32 0, %v591
        %v593 = vrot.slane %v589, %v592
        %v594 = vmul.f32 %v593, %v536
        %v595 = vmul.f32 %v593, %v537
        %vm596 = vcmask 261120
        %v597 = vsel %vm596, %v594, 0.0
        %598 = vadd.xlane.f32.xlu0 %v597
        %v599 = vpop.xlane.xlu0 %598
        %v600 = vsel %vm596, %v595, 0.0
        %601 = vadd.xlane.f32.xlu0 %v600
        %v602 = vpop.xlane.xlu0 %601
        %v604 = vlaneseq
        %v605 = vshrl.u32 %v604, 7
        %v606 = vsub.s32 0, %v605
        %v607 = vrot.slane %v538, %v606
        %609 = vbcast.lane.b32.xlu0 %v607, 256
        %v610 = vpop.permute.xlu0 %609
        %s612 = sor.u32 256, 8
        %613 = vbcast.lane.b32.xlu0 %v607, %s612
        %v614 = vpop.permute.xlu0 %613
        %v617 = vadd.f32 %v599, %v610
        %v618 = vadd.f32 %v602, %v614
        %v619 = vmax.f32 %v617, 0.0
        %v620 = vmax.f32 %v618, 0.0
        %v622 = vlaneseq
        %v623 = vshrl.u32 %v622, 7
        %v624 = vsub.s32 0, %v623
        %v625 = vrot.slane %v539, %v624
        %627 = vbcast.lane.b32.xlu0 %v625, 256
        %v628 = vpop.permute.xlu0 %627
        %s630 = sor.u32 256, 8
        %631 = vbcast.lane.b32.xlu0 %v625, %s630
        %v632 = vpop.permute.xlu0 %631
        %v633 = vlaneseq
        %v634 = vshrl.u32 %v633, 7
        %v635 = vsub.s32 1, %v634
        %v636 = vrot.slane %v539, %v635
        %638 = vbcast.lane.b32.xlu0 %v636, 256
        %v639 = vpop.permute.xlu0 %638
        %s641 = sor.u32 256, 8
        %642 = vbcast.lane.b32.xlu0 %v636, %s641
        %v643 = vpop.permute.xlu0 %642
        %v648 = vmul.f32 %v619, %v628
        %v649 = vmul.f32 %v620, %v632
        %v650 = vmul.f32 %v619, %v639
        %v651 = vmul.f32 %v620, %v643
        %656 = vset.pattern.permute.xlu0 0
        %657 = vperm.xlu0 %656, %v648
        %v658 = vpop.permute.xlu0 %657
        %659 = vset.pattern.permute.xlu0 0
        %660 = vperm.xlu0 %659, %v649
        %v661 = vpop.permute.xlu0 %660
        %662 = vset.pattern.permute.xlu0 0
        %663 = vperm.xlu0 %662, %v650
        %v664 = vpop.permute.xlu0 %663
        %665 = vset.pattern.permute.xlu0 0
        %666 = vperm.xlu0 %665, %v651
        %v667 = vpop.permute.xlu0 %666
        %v668 = vlaneseq
        %v669 = vshrl.u32 %v668, 7
        %v670 = vsub.s32 %v557, %v669
        %v671 = vrot.slane %v658, %v670
        %v672 = vlaneseq
        %v673 = vshrl.u32 %v672, 7
        %v674 = vsub.s32 %v564, %v673
        %v675 = vrot.slane %v661, %v674
        %vm676 = vcmask 130112
        %v677 = vsel %vm676, %v675, %v671
        %v678 = vlaneseq
        %v679 = vshrl.u32 %v678, 7
        %v680 = vsub.s32 %v557, %v679
        %v681 = vrot.slane %v664, %v680
        %v682 = vlaneseq
        %v683 = vshrl.u32 %v682, 7
        %v684 = vsub.s32 %v564, %v683
        %v685 = vrot.slane %v667, %v684
        %v686 = vsel %vm676, %v685, %v681
        %vm687 = vcmask 1041409
        %v688 = vsel %vm687, %v686, %v677
        %vm690 = vcmask 123904
        %v691 = vsel %vm690, %v688, 0.0
        %692 = vadd.xlane.f32.xlu0 %v691
        %v693 = vpop.xlane.xlu0 %692
        %v695 = vlaneseq
        %v696 = vshrl.u32 %v695, 7
        %v697 = vsub.s32 0, %v696
        %v698 = vrot.slane %v540, %v697
        %700 = vbcast.lane.b32.xlu0 %v698, 256
        %v701 = vpop.permute.xlu0 %700
        %v703 = vadd.f32 %v693, %v701
        %v704 = vtanh.pop %v703
        %v705 = vmax.f32 %v704, 0.0
        %707 = vset.pattern.permute.xlu0 0
        %708 = vperm.xlu0 %707, %v705
        %v709 = vpop.permute.xlu0 %708
        %v710 = vlaneseq
        %v711 = vshrl.u32 %v710, 7
        %v712 = vsub.s32 %v557, %v711
        %v713 = vrot.slane %v709, %v712
        %vm715 = vcmask 8192
        %716 = vst.msk [vmem:[%s526] sm:$0x1] %vm715, %v713
        %v717 = vrot.slane %v550, 7
        %vm719 = vcmask 1040384
        %v720 = vsel %vm719, 0.0, %v717
        %v721 = vsel %vm719, %v717, 0.0
        %s722 = sld [smem:[#allocation11]]
        %v723 = vstv %s722
        %v724 = vmul.f32 %v723, %v720
        %s725 = sld [smem:[#allocation11 + $0x1]]
        %v726 = vstv %s725
        %v727 = vmul.f32 %v726, %v550
        %v728 = vadd.f32 %v724, %v727
        %s729 = sld [smem:[#allocation11 + $0x2]]
        %v730 = vstv %s729
        %v731 = vmul.f32 %v730, %v720
        %v732 = vmul.f32 %v730, %v721
        %vm735 = vcmask 1045504
        %v736 = vrot.slane %v731, 2
        %v737 = vrot.slane %v732, 2
        %v738 = vsel %vm735, %v736, %v737
        %v740 = vadd.f32 %v728, %v738
        %s741 = sld [smem:[#allocation2]]
        %v742 = vstv %s741
        %v743 = vadd.f32 %v740, %v742
        %v744 = vxor.u32 %v743, 2147483648
        %v745 = vmul.f32 %v744, 1.442695
        %v746 = vpow.pop %v745
        %v747 = vadd.f32 %v746, 1.0
        %v748 = vrcp.pop %v747
        %v749 = vmul.f32 1.0, %v748
        %751 = vset.pattern.permute.xlu0 0
        %752 = vperm.xlu0 %751, %v749
        %v753 = vpop.permute.xlu0 %752
        %v755 = vmul.f32 %v532, %v753
        %v756 = vmul.f32 %v533, %v753
        %757 = vst [vmem:[%s513] sm:$0xff] %v755
        %758 = vst [vmem:[%s513 + $0x8] sm:$0xff] %v756
        %v759 = vrot.slane %v554, 7
        %v761 = vsel %vm719, 0.0, %v759
        %v762 = vsel %vm719, %v759, 0.0
        %s763 = sld [smem:[#allocation12]]
        %v764 = vstv %s763
        %v765 = vmul.f32 %v764, %v761
        %s766 = sld [smem:[#allocation12 + $0x1]]
        %v767 = vstv %s766
        %v768 = vmul.f32 %v767, %v554
        %v769 = vadd.f32 %v765, %v768
        %s770 = sld [smem:[#allocation12 + $0x2]]
        %v771 = vstv %s770
        %v772 = vmul.f32 %v771, %v761
        %v773 = vmul.f32 %v771, %v762
        %v776 = vrot.slane %v772, 2
        %v777 = vrot.slane %v773, 2
        %v778 = vsel %vm735, %v776, %v777
        %v780 = vadd.f32 %v769, %v778
        %s781 = sld [smem:[#allocation3]]
        %v782 = vstv %s781
        %v783 = vadd.f32 %v780, %v782
        %v784 = vxor.u32 %v783, 2147483648
        %v785 = vmul.f32 %v784, 1.442695
        %v786 = vpow.pop %v785
        %v787 = vadd.f32 %v786, 1.0
        %v788 = vrcp.pop %v787
        %v789 = vmul.f32 1.0, %v788
        %791 = vset.pattern.permute.xlu0 0
        %792 = vperm.xlu0 %791, %v789
        %v793 = vpop.permute.xlu0 %792
        %v795 = vmul.f32 %v534, %v793
        %v796 = vmul.f32 %v535, %v793
        %797 = vst [vmem:[%s520] sm:$0xff] %v795
        %798 = vst [vmem:[%s520 + $0x8] sm:$0xff] %v796
        %s799 = sand.u32 %s267, 1
        %s800 = scalar_lea.sflag [#allocation6], %s799
        %s801 = sand.u32 %s267, 1
        %s802 = smul.addr %s801, 16
        %s803 = scalar_lea.vmem [#allocation16], %s802
        %s804 = sand.u32 %s39, 1
        %s805 = scalar_lea.sflag [#allocation18], %s804
        %s806 = sand.u32 %s293, 1
        %s807 = smul.addr %s806, 16
        %s808 = scalar_lea.vmem [#allocation17], %s807
        %s809 = sand.u32 %s39, 1
        %s810 = scalar_lea.sflag [#allocation18], %s809
        %s811 = sand.u32 %s319, 1
        %s812 = scalar_lea.vmem [#allocation19], %s811
        // Predicated region
        $region85: #{tpu_custom_call.1} parent=59 // pred_check
          %p813 = pneg %p277
        $region86: #{tpu_custom_call.1} parent=59 // pred_check_branch
          %815 = sbr.rel (%p813) target = $region88
        $region87: #{tpu_custom_call.1} parent=59 // pred_region
          %s817 = ssub.s32 256, 256
          %818 = vsyncadd %s800, %s817
          %s819 = smul.addr %s39, 2
          %s820 = smul.addr %s819, 128
          %s821 = scalar_lea.hbm %s10, %s820
          %s823 = sshll.u32 %s803, 4
          %s824 = int_to_ptr.vmem [resolvable:$true] %s823
          %826 = dma.vmem_to_hbm [thread:$0]  %s824, 256, %s821, %s800
        $region88: #{tpu_custom_call.1} parent=59 // pred_fallthru
          _
        // Predicated region
        $region89: #{tpu_custom_call.1} parent=59 // pred_check
          %p827 = pneg %p303
        $region90: #{tpu_custom_call.1} parent=59 // pred_check_branch
          %829 = sbr.rel (%p827) target = $region92
        $region91: #{tpu_custom_call.1} parent=59 // pred_region
          %s831 = ssub.s32 256, 256
          %832 = vsyncadd %s805, %s831
          %s833 = smul.addr %s39, 2
          %s834 = smul.addr %s833, 128
          %s835 = scalar_lea.hbm %s11, %s834
          %s837 = sshll.u32 %s808, 4
          %s838 = int_to_ptr.vmem [resolvable:$true] %s837
          %840 = dma.vmem_to_hbm [thread:$0]  %s838, 256, %s835, %s805
        $region92: #{tpu_custom_call.1} parent=59 // pred_fallthru
          _
        // Predicated region
        $region93: #{tpu_custom_call.1} parent=59 // pred_check
          %p841 = pneg %p329
        $region94: #{tpu_custom_call.1} parent=59 // pred_check_branch
          %843 = sbr.rel (%p841) target = $region96
        $region95: #{tpu_custom_call.1} parent=59 // pred_region
          %s845 = ssub.s32 16, 16
          %846 = vsyncadd %s810, %s845
          %s847 = smul.addr %s39, 16
          %s848 = scalar_lea.hbm %s12, %s847
          %s850 = sshll.u32 %s812, 4
          %s851 = int_to_ptr.vmem [resolvable:$true] %s850
          %853 = dma.vmem_to_hbm [thread:$0]  %s851, 16, %s848, %s810
        $region96: #{tpu_custom_call.1} parent=59 // pred_fallthru
          _
      $region60: #{tpu_custom_call.1} parent=5 // pred_fallthru
        _
      %p854 = scmp.le.s32.totalorder 2, %s34
      // Predicated region
      $region97: #{tpu_custom_call.1} parent=5 // pred_check
        %p855 = pneg %p854
      $region98: #{tpu_custom_call.1} parent=5 // pred_check_branch
        %857 = sbr.rel (%p855) target = $region100
      $region99: #{tpu_custom_call.1} parent=5 // pred_region
        %s858 = ssub.s32 %s34, 2
        // Predicated region
        $region101: #{tpu_custom_call.1} parent=99 // pred_check
          %p859 = pneg %p283
        $region102: #{tpu_custom_call.1} parent=99 // pred_check_branch
          %861 = sbr.rel (%p859) target = $region104
        $region103: #{tpu_custom_call.1} parent=99 // pred_region
          %s862 = sand.u32 %s268, 1
          %s863 = scalar_lea.sflag [#allocation6], %s862
          %s864 = sand.u32 %s268, 1
          %s865 = smul.addr %s864, 16
          %s866 = scalar_lea.vmem [#allocation16], %s865
          %867 = dma.done %s863, 256
        $region104: #{tpu_custom_call.1} parent=99 // pred_fallthru
          _
        // Predicated region
        $region105: #{tpu_custom_call.1} parent=99 // pred_check
          %p868 = pneg %p309
        $region106: #{tpu_custom_call.1} parent=99 // pred_check_branch
          %870 = sbr.rel (%p868) target = $region108
        $region107: #{tpu_custom_call.1} parent=99 // pred_region
          %s871 = sand.u32 %s40, 1
          %s872 = scalar_lea.sflag [#allocation18], %s871
          %s873 = sand.u32 %s294, 1
          %s874 = smul.addr %s873, 16
          %s875 = scalar_lea.vmem [#allocation17], %s874
          %876 = dma.done %s872, 256
        $region108: #{tpu_custom_call.1} parent=99 // pred_fallthru
          _
        // Predicated region
        $region109: #{tpu_custom_call.1} parent=99 // pred_check
          %p877 = pneg %p335
        $region110: #{tpu_custom_call.1} parent=99 // pred_check_branch
          %879 = sbr.rel (%p877) target = $region112
        $region111: #{tpu_custom_call.1} parent=99 // pred_region
          %s880 = sand.u32 %s40, 1
          %s881 = scalar_lea.sflag [#allocation18], %s880
          %s882 = sand.u32 %s320, 1
          %s883 = scalar_lea.vmem [#allocation19], %s882
          %884 = dma.done %s881, 16
        $region112: #{tpu_custom_call.1} parent=99 // pred_fallthru
          _
      $region100: #{tpu_custom_call.1} parent=5 // pred_fallthru
        _
    $region6: #{tpu_custom_call.1} parent=1 // loop_footer
      %s38 = sadd.s32 1, %s34
    $region7: #{tpu_custom_call.1} parent=1 // loop_footer_branch
      %33 = sbr.rel target = $region3
    $region8: #{tpu_custom_call.1} parent=1 // loop_exit
      _
    %885 = vsyncpa [#allocation5], 1
    %s886 = scalar_lea.sflag [#allocation5], 1
    %887 = vsyncpa %s886, 1
    %888 = vsyncpa [#allocation9], 1
    %889 = vsyncpa [#allocation15], 1
    %s890 = scalar_lea.sflag [#allocation15], 1
    %891 = vsyncpa %s890, 1
    %892 = vsyncpa [#allocation6], 1
    %s893 = scalar_lea.sflag [#allocation6], 1
    %894 = vsyncpa %s893, 1
    %895 = vsyncpa [#allocation18], 1
    %s896 = scalar_lea.sflag [#allocation18], 1
    %897 = vsyncpa %s896, 1
    %898 = vsyncpa [#allocation7], 1
    %s899 = scalar_lea.sflag [#allocation7], 1
    %900 = vsyncpa %s899, 1
    %901 = vsyncpa [#allocation13], 1

</llo_original>
